<compile_context>
chip_gen: v5e
topology: v5e:2x2
jax: 0.10.0
libtpu: 0.0.40
codegen_flags: <defaults>
</compile_context>

<pallas_src>
import functools

import jax
import jax.numpy as jnp
import numpy as np
from jax.experimental import pallas as pl
from jax.experimental.pallas import tpu as pltpu


def _unet_block_kernel(x_ref, w1_ref, b1_ref, w2_ref, b2_ref, o_ref,
                       xp1_ref, xp2_ref, *, H, W, Cin, Cout, ksize, pad):
    # x_ref  : (1, H, W*Cin)       bf16  input slab (NHWC flattened, lane-dense)
    # w1_ref : (k, W*Cin,  W*Cout) bf16  banded conv1 weights (dx + BN scale folded)
    # w2_ref : (k, W*Cout, W*Cout) bf16  banded conv2 weights
    # b*_ref : (1, W*Cout)         f32   folded conv-bias + BN bias, tiled over W
    # o_ref  : (1, H, W*Cout)      f32   output slab (lane-dense)
    # xp*_ref: (Hp, W*C)           bf16  VMEM row-halo scratch

    # Zero only the 2*pad halo rows; the interior is fully overwritten below on
    # every grid step.  (Per-step, not @pl.when(pid==0): with "parallel" grid
    # semantics each TensorCore has its own scratch and only one would run step 0.)
    xp1_ref[pl.ds(0, pad), :] = jnp.zeros((pad, W * Cin), xp1_ref.dtype)
    xp1_ref[pl.ds(H + pad, pad), :] = jnp.zeros((pad, W * Cin), xp1_ref.dtype)
    xp2_ref[pl.ds(0, pad), :] = jnp.zeros((pad, W * Cout), xp2_ref.dtype)
    xp2_ref[pl.ds(H + pad, pad), :] = jnp.zeros((pad, W * Cout), xp2_ref.dtype)

    # ---- layer 1: interior copy at lane offset 0, 3 banded MXU matmuls, bias+ReLU
    xp1_ref[pl.ds(pad, H), :] = x_ref[0]
    acc1 = jnp.zeros((H, W * Cout), jnp.float32)
    for dy in range(ksize):  # static unroll: 3 matmuls, K=W*Cin, N=W*Cout
        acc1 = acc1 + jnp.dot(xp1_ref[pl.ds(dy, H), :], w1_ref[dy],
                              preferred_element_type=jnp.float32)
    y1 = jnp.maximum(acc1 + b1_ref[...], 0.0)

    # ---- layer 2: inter-layer activation never leaves VMEM ----------------------
    xp2_ref[pl.ds(pad, H), :] = y1.astype(jnp.bfloat16)
    acc2 = jnp.zeros((H, W * Cout), jnp.float32)
    for dy in range(ksize):
        acc2 = acc2 + jnp.dot(xp2_ref[pl.ds(dy, H), :], w2_ref[dy],
                              preferred_element_type=jnp.float32)
    o_ref[0] = jnp.maximum(acc2 + b2_ref[...], 0.0)


def _fused_block_slab(x2d, w1b, b1t, w2b, b2t, *, Cin, Cout, ksize):
    """(N, H, W*Cin) bf16 slab -> (N, H, W*Cout) f32 slab in one pallas_call."""
    N, H, WCin = x2d.shape
    W = WCin // Cin
    pad = ksize // 2
    Hp = H + 2 * pad

    kernel = functools.partial(_unet_block_kernel, H=H, W=W, Cin=Cin, Cout=Cout,
                               ksize=ksize, pad=pad)
    return pl.pallas_call(
        kernel,
        out_shape=jax.ShapeDtypeStruct((N, H, W * Cout), jnp.float32),
        grid=(N,),
        in_specs=[
            pl.BlockSpec((1, H, W * Cin), lambda b: (b, 0, 0)),
            pl.BlockSpec((ksize, W * Cin, W * Cout), lambda b: (0, 0, 0)),
            pl.BlockSpec((1, W * Cout), lambda b: (0, 0)),
            pl.BlockSpec((ksize, W * Cout, W * Cout), lambda b: (0, 0, 0)),
            pl.BlockSpec((1, W * Cout), lambda b: (0, 0)),
        ],
        out_specs=pl.BlockSpec((1, H, W * Cout), lambda b: (b, 0, 0)),
        scratch_shapes=[
            pltpu.VMEM((Hp, W * Cin), jnp.bfloat16),   # row-padded input
            pltpu.VMEM((Hp, W * Cout), jnp.bfloat16),  # row-padded activation
        ],
        compiler_params=pltpu.CompilerParams(
            dimension_semantics=("parallel",),
            vmem_limit_bytes=32 * 1024 * 1024),
    )(x2d, w1b, b1t, w2b, b2t)


def _fused_block_nchw(x_nchw, w1b, b1t, w2b, b2t, *, Cin, Cout, ksize):
    """NCHW f32 -> NCHW f32; layout changes fuse with the kernel under jit."""
    N, _, H, W = x_nchw.shape
    x2d = jnp.transpose(x_nchw.astype(jnp.float32), (0, 2, 3, 1))
    x2d = x2d.reshape(N, H, W * Cin).astype(jnp.bfloat16)
    out2d = _fused_block_slab(x2d, w1b, b1t, w2b, b2t,
                              Cin=Cin, Cout=Cout, ksize=ksize)
    return jnp.transpose(out2d.reshape(N, H, W, Cout), (0, 3, 1, 2))


def _banded_weights(w_hwio_f32, W):
    """Fold dx taps (incl. zero-padding at the W boundary) of a (k,k,Cin,Cout)
    kernel into a block-banded (k, W*Cin, W*Cout) bf16 matrix.  Runs ONCE per
    module/W in __init__/cache, never in the per-call path."""
    k, _, ci, co = w_hwio_f32.shape
    pad = k // 2
    wnp = np.asarray(w_hwio_f32, dtype=np.float32)
    big = np.zeros((k, W * ci, W * co), dtype=np.float32)
    for dy in range(k):
        for w in range(W):
            for dx in range(k):
                src = w + dx - pad
                if 0 <= src < W:
                    big[dy, src * ci:(src + 1) * ci,
                        w * co:(w + 1) * co] = wnp[dy, dx]
    return jnp.asarray(big, dtype=jnp.bfloat16)


class UNetConvBlockPallas:
    """JAX/Pallas port of UNetConvBlock (inference semantics, BN folded)."""

    def __init__(self, in_channels, out_channels, dropout_rate=0.1, *, key):
        self.ksize = 3
        self.in_channels = in_channels
        self.out_channels = out_channels
        eps = 1e-5
        self._folded = []  # [(w_hwio f32 with BN scale folded in, bias f32)] * 2

        cin = in_channels
        for cout in (out_channels, out_channels):
            key, kw, kb, kg, kbeta, km, kv = jax.random.split(key, 7)
            fan_in = cin * self.ksize * self.ksize
            bound = 1.0 / float(np.sqrt(fan_in))
            # Conv2d default init (kaiming-uniform a=sqrt(5) -> +-1/sqrt(fan_in)),
            # torch (Cout, Cin, k, k) layout, plus default bias.
            w_oihw = jax.random.uniform(kw, (cout, cin, self.ksize, self.ksize),
                                        minval=-bound, maxval=bound,
                                        dtype=jnp.float32)
            conv_bias = jax.random.uniform(kb, (cout,), minval=-bound,
                                           maxval=bound, dtype=jnp.float32)
            w_hwio = jnp.transpose(w_oihw, (2, 3, 1, 0))  # (k, k, Cin, Cout)

            # Deterministic, nontrivial eval-mode BatchNorm2d params + running
            # stats, folded with the conv bias: y = conv(x, scale*w) + bias.
            gamma = 1.0 + 0.1 * jax.random.normal(kg, (cout,), jnp.float32)
            beta = 0.1 * jax.random.normal(kbeta, (cout,), jnp.float32)
            running_mean = 0.1 * jax.random.normal(km, (cout,), jnp.float32)
            running_var = 1.0 + 0.1 * jax.random.uniform(kv, (cout,), jnp.float32)
            scale = gamma / jnp.sqrt(running_var + eps)
            bias = beta + scale * (conv_bias - running_mean)

            self._folded.append((w_hwio * scale[None, None, None, :], bias))
            cin = cout

        # Kernel-ready operands are built once per spatial width and cached.
        self._prep_cache = {}
        common = dict(Cin=in_channels, Cout=out_channels, ksize=self.ksize)
        self._fwd_nchw = jax.jit(functools.partial(_fused_block_nchw, **common))
        self._fwd_slab = jax.jit(functools.partial(_fused_block_slab, **common))

    def _prepared(self, W):
        if W not in self._prep_cache:
            (w1, b1), (w2, b2) = self._folded
            co = self.out_channels
            self._prep_cache[W] = (
                _banded_weights(w1, W),
                jnp.tile(b1, W).reshape(1, W * co).astype(jnp.float32),
                _banded_weights(w2, W),
                jnp.tile(b2, W).reshape(1, W * co).astype(jnp.float32),
            )
        return self._prep_cache[W]

    def __call__(self, x_nchw):
        W = x_nchw.shape[-1]
        return self._fwd_nchw(x_nchw, *self._prepared(W))

    def forward_slab(self, x_slab_bf16, W):
        """Lane-dense (N, H, W*Cin) bf16 -> (N, H, W*Cout) f32.  Use this when
        chaining UNet blocks to keep activations in the slab layout (no NCHW
        transposes / HBM round trips between blocks)."""
        return self._fwd_slab(x_slab_bf16, *self._prepared(W))

    def reference(self, x_nchw):
        """Pure-JAX f32 reference (lax conv) with the same folded parameters."""
        x = jnp.transpose(x_nchw.astype(jnp.float32), (0, 2, 3, 1))
        for w_hwio, bias in self._folded:
            y = jax.lax.conv_general_dilated(
                x, w_hwio, window_strides=(1, 1), padding="SAME",
                dimension_numbers=("NHWC", "HWIO", "NHWC"))
            x = jnp.maximum(y + bias, 0.0)
        return jnp.transpose(x, (0, 3, 1, 2))


if __name__ == "__main__":
    key = jax.random.PRNGKey(0)
    key, k_in = jax.random.split(key)

    batch, in_channels, out_channels, H, W = 2, 4, 16, 16, 16
    block = UNetConvBlockPallas(in_channels, out_channels, dropout_rate=0.1,
                                key=key)
    x = jax.random.normal(k_in, (batch, in_channels, H, W), dtype=jnp.float32)

    out = jax.block_until_ready(block(x))
    assert out.shape == (batch, out_channels, H, W), out.shape
    assert bool(jnp.all(out >= 0.0))  # ReLU output

    ref = jax.block_until_ready(block.reference(x))
    max_err = float(jnp.max(jnp.abs(out - ref)))
    assert max_err < 5e-2, f"mismatch vs reference: {max_err}"

    # Second call exercises the cached / jitted fast path (no host-side prep).
    out2 = jax.block_until_ready(block(x))
    assert bool(jnp.allclose(out, out2))

    print("KERNEL_OK")
</pallas_src>

<mosaic_0001>
module attributes {stable_mosaic.version = 11 : i64} {
  func.func @_unet_block_kernel(%arg0: i32, %arg1: memref<1x16x64xbf16, #tpu.memory_space<vmem>>, %arg2: memref<3x64x256xbf16, #tpu.memory_space<vmem>>, %arg3: memref<1x256xf32, #tpu.memory_space<vmem>>, %arg4: memref<3x256x256xbf16, #tpu.memory_space<vmem>>, %arg5: memref<1x256xf32, #tpu.memory_space<vmem>>, %arg6: memref<1x16x256xf32, #tpu.memory_space<vmem>>, %arg7: memref<18x64xbf16, #tpu.memory_space<vmem>>, %arg8: memref<18x256xbf16, #tpu.memory_space<vmem>>) attributes {dimension_semantics = [#tpu.dimension_semantics<parallel>], iteration_bounds = array<i64: 2>, scalar_prefetch = 0 : i64, scratch_operands = 2 : i64, tpu.core_type = #tpu.core_type<tc>, window_params = [{transform_indices = @transform_0, window_bounds = array<i64: 1, 16, 64>}, {pipeline_mode = #tpu.pipeline_mode<synchronous>, transform_indices = @transform_1, window_bounds = array<i64: 3, 64, 256>}, {pipeline_mode = #tpu.pipeline_mode<synchronous>, transform_indices = @transform_2, window_bounds = array<i64: 1, 256>}, {pipeline_mode = #tpu.pipeline_mode<synchronous>, transform_indices = @transform_3, window_bounds = array<i64: 3, 256, 256>}, {pipeline_mode = #tpu.pipeline_mode<synchronous>, transform_indices = @transform_4, window_bounds = array<i64: 1, 256>}, {transform_indices = @transform_5, window_bounds = array<i64: 1, 16, 256>}]} {
    %cst = arith.constant 0.000000e+00 : bf16
    %0 = vector.broadcast %cst : bf16 to vector<1x64xbf16>
    %c0 = arith.constant 0 : index
    %c0_0 = arith.constant 0 : index
    %1 = vector.load %arg7[%c0, %c0_0] : memref<18x64xbf16, #tpu.memory_space<vmem>>, vector<1x64xbf16>
    tpu.vector_store %arg7[%c0, %c0_0], %0 {strides = array<i32>} : memref<18x64xbf16, #tpu.memory_space<vmem>>, vector<1x64xbf16>,
    %cst_1 = arith.constant 0.000000e+00 : bf16
    %2 = vector.broadcast %cst_1 : bf16 to vector<1x64xbf16>
    %c17 = arith.constant 17 : index
    %c0_2 = arith.constant 0 : index
    %3 = vector.load %arg7[%c17, %c0_2] : memref<18x64xbf16, #tpu.memory_space<vmem>>, vector<1x64xbf16>
    tpu.vector_store %arg7[%c17, %c0_2], %2 {strides = array<i32>} : memref<18x64xbf16, #tpu.memory_space<vmem>>, vector<1x64xbf16>,
    %cst_3 = arith.constant 0.000000e+00 : bf16
    %4 = vector.broadcast %cst_3 : bf16 to vector<1x256xbf16>
    %c0_4 = arith.constant 0 : index
    %c0_5 = arith.constant 0 : index
    %5 = vector.load %arg8[%c0_4, %c0_5] : memref<18x256xbf16, #tpu.memory_space<vmem>>, vector<1x256xbf16>
    tpu.vector_store %arg8[%c0_4, %c0_5], %4 {strides = array<i32>} : memref<18x256xbf16, #tpu.memory_space<vmem>>, vector<1x256xbf16>,
    %cst_6 = arith.constant 0.000000e+00 : bf16
    %6 = vector.broadcast %cst_6 : bf16 to vector<1x256xbf16>
    %c17_7 = arith.constant 17 : index
    %c0_8 = arith.constant 0 : index
    %7 = vector.load %arg8[%c17_7, %c0_8] : memref<18x256xbf16, #tpu.memory_space<vmem>>, vector<1x256xbf16>
    tpu.vector_store %arg8[%c17_7, %c0_8], %6 {strides = array<i32>} : memref<18x256xbf16, #tpu.memory_space<vmem>>, vector<1x256xbf16>,
    %c0_9 = arith.constant 0 : index
    %c0_10 = arith.constant 0 : index
    %c0_11 = arith.constant 0 : index
    %8 = vector.load %arg1[%c0_9, %c0_10, %c0_11] : memref<1x16x64xbf16, #tpu.memory_space<vmem>>, vector<1x16x64xbf16>
    %9 = vector.shape_cast %8 : vector<1x16x64xbf16> to vector<16x64xbf16>
    %c1 = arith.constant 1 : index
    %c0_12 = arith.constant 0 : index
    %10 = vector.load %arg7[%c1, %c0_12] : memref<18x64xbf16, #tpu.memory_space<vmem>>, vector<16x64xbf16>
    tpu.vector_store %arg7[%c1, %c0_12], %9 {strides = array<i32>} : memref<18x64xbf16, #tpu.memory_space<vmem>>, vector<16x64xbf16>,
    %cst_13 = arith.constant 0.000000e+00 : f32
    %11 = vector.broadcast %cst_13 : f32 to vector<16x256xf32>
    %c0_14 = arith.constant 0 : index
    %c0_15 = arith.constant 0 : index
    %12 = vector.load %arg7[%c0_14, %c0_15] : memref<18x64xbf16, #tpu.memory_space<vmem>>, vector<16x64xbf16>
    %c0_16 = arith.constant 0 : index
    %c0_17 = arith.constant 0 : index
    %c0_18 = arith.constant 0 : index
    %13 = vector.load %arg2[%c0_16, %c0_17, %c0_18] : memref<3x64x256xbf16, #tpu.memory_space<vmem>>, vector<1x64x256xbf16>
    %14 = vector.shape_cast %13 : vector<1x64x256xbf16> to vector<64x256xbf16>
    %cst_19 = arith.constant dense<0.000000e+00> : vector<16x256xf32>
    %15 = tpu.matmul %12, %14, %cst_19 {dimension_numbers = #tpu.dot_dimension_numbers<[1], [0], [0], [1], [0, 0, 1, 1], [], []>} : vector<16x64xbf16>, vector<64x256xbf16>, vector<16x256xf32> -> vector<16x256xf32>
    %16 = arith.addf %11, %15 : vector<16x256xf32>
    %c1_20 = arith.constant 1 : index
    %c0_21 = arith.constant 0 : index
    %17 = vector.load %arg7[%c1_20, %c0_21] : memref<18x64xbf16, #tpu.memory_space<vmem>>, vector<16x64xbf16>
    %c1_22 = arith.constant 1 : index
    %c0_23 = arith.constant 0 : index
    %c0_24 = arith.constant 0 : index
    %18 = vector.load %arg2[%c1_22, %c0_23, %c0_24] : memref<3x64x256xbf16, #tpu.memory_space<vmem>>, vector<1x64x256xbf16>
    %19 = vector.shape_cast %18 : vector<1x64x256xbf16> to vector<64x256xbf16>
    %cst_25 = arith.constant dense<0.000000e+00> : vector<16x256xf32>
    %20 = tpu.matmul %17, %19, %cst_25 {dimension_numbers = #tpu.dot_dimension_numbers<[1], [0], [0], [1], [0, 0, 1, 1], [], []>} : vector<16x64xbf16>, vector<64x256xbf16>, vector<16x256xf32> -> vector<16x256xf32>
    %21 = arith.addf %16, %20 : vector<16x256xf32>
    %c2 = arith.constant 2 : index
    %c0_26 = arith.constant 0 : index
    %22 = vector.load %arg7[%c2, %c0_26] : memref<18x64xbf16, #tpu.memory_space<vmem>>, vector<16x64xbf16>
    %c2_27 = arith.constant 2 : index
    %c0_28 = arith.constant 0 : index
    %c0_29 = arith.constant 0 : index
    %23 = vector.load %arg2[%c2_27, %c0_28, %c0_29] : memref<3x64x256xbf16, #tpu.memory_space<vmem>>, vector<1x64x256xbf16>
    %24 = vector.shape_cast %23 : vector<1x64x256xbf16> to vector<64x256xbf16>
    %cst_30 = arith.constant dense<0.000000e+00> : vector<16x256xf32>
    %25 = tpu.matmul %22, %24, %cst_30 {dimension_numbers = #tpu.dot_dimension_numbers<[1], [0], [0], [1], [0, 0, 1, 1], [], []>} : vector<16x64xbf16>, vector<64x256xbf16>, vector<16x256xf32> -> vector<16x256xf32>
    %26 = arith.addf %21, %25 : vector<16x256xf32>
    %c0_31 = arith.constant 0 : index
    %c0_32 = arith.constant 0 : index
    %27 = vector.load %arg3[%c0_31, %c0_32] : memref<1x256xf32, #tpu.memory_space<vmem>>, vector<1x256xf32>
    %28 = vector.broadcast %27 : vector<1x256xf32> to vector<16x256xf32>
    %29 = arith.addf %26, %28 : vector<16x256xf32>
    %cst_33 = arith.constant 0.000000e+00 : f32
    %30 = vector.broadcast %cst_33 : f32 to vector<16x256xf32>
    %31 = arith.maximumf %29, %30 : vector<16x256xf32>
    %32 = arith.truncf %31 : vector<16x256xf32> to vector<16x256xbf16>
    %c1_34 = arith.constant 1 : index
    %c0_35 = arith.constant 0 : index
    %33 = vector.load %arg8[%c1_34, %c0_35] : memref<18x256xbf16, #tpu.memory_space<vmem>>, vector<16x256xbf16>
    tpu.vector_store %arg8[%c1_34, %c0_35], %32 {strides = array<i32>} : memref<18x256xbf16, #tpu.memory_space<vmem>>, vector<16x256xbf16>,
    %cst_36 = arith.constant 0.000000e+00 : f32
    %34 = vector.broadcast %cst_36 : f32 to vector<16x256xf32>
    %c0_37 = arith.constant 0 : index
    %c0_38 = arith.constant 0 : index
    %35 = vector.load %arg8[%c0_37, %c0_38] : memref<18x256xbf16, #tpu.memory_space<vmem>>, vector<16x256xbf16>
    %c0_39 = arith.constant 0 : index
    %c0_40 = arith.constant 0 : index
    %c0_41 = arith.constant 0 : index
    %36 = vector.load %arg4[%c0_39, %c0_40, %c0_41] : memref<3x256x256xbf16, #tpu.memory_space<vmem>>, vector<1x256x256xbf16>
    %37 = vector.shape_cast %36 : vector<1x256x256xbf16> to vector<256x256xbf16>
    %cst_42 = arith.constant dense<0.000000e+00> : vector<16x256xf32>
    %38 = tpu.matmul %35, %37, %cst_42 {dimension_numbers = #tpu.dot_dimension_numbers<[1], [0], [0], [1], [0, 0, 1, 1], [], []>} : vector<16x256xbf16>, vector<256x256xbf16>, vector<16x256xf32> -> vector<16x256xf32>
    %39 = arith.addf %34, %38 : vector<16x256xf32>
    %c1_43 = arith.constant 1 : index
    %c0_44 = arith.constant 0 : index
    %40 = vector.load %arg8[%c1_43, %c0_44] : memref<18x256xbf16, #tpu.memory_space<vmem>>, vector<16x256xbf16>
    %c1_45 = arith.constant 1 : index
    %c0_46 = arith.constant 0 : index
    %c0_47 = arith.constant 0 : index
    %41 = vector.load %arg4[%c1_45, %c0_46, %c0_47] : memref<3x256x256xbf16, #tpu.memory_space<vmem>>, vector<1x256x256xbf16>
    %42 = vector.shape_cast %41 : vector<1x256x256xbf16> to vector<256x256xbf16>
    %cst_48 = arith.constant dense<0.000000e+00> : vector<16x256xf32>
    %43 = tpu.matmul %40, %42, %cst_48 {dimension_numbers = #tpu.dot_dimension_numbers<[1], [0], [0], [1], [0, 0, 1, 1], [], []>} : vector<16x256xbf16>, vector<256x256xbf16>, vector<16x256xf32> -> vector<16x256xf32>
    %44 = arith.addf %39, %43 : vector<16x256xf32>
    %c2_49 = arith.constant 2 : index
    %c0_50 = arith.constant 0 : index
    %45 = vector.load %arg8[%c2_49, %c0_50] : memref<18x256xbf16, #tpu.memory_space<vmem>>, vector<16x256xbf16>
    %c2_51 = arith.constant 2 : index
    %c0_52 = arith.constant 0 : index
    %c0_53 = arith.constant 0 : index
    %46 = vector.load %arg4[%c2_51, %c0_52, %c0_53] : memref<3x256x256xbf16, #tpu.memory_space<vmem>>, vector<1x256x256xbf16>
    %47 = vector.shape_cast %46 : vector<1x256x256xbf16> to vector<256x256xbf16>
    %cst_54 = arith.constant dense<0.000000e+00> : vector<16x256xf32>
    %48 = tpu.matmul %45, %47, %cst_54 {dimension_numbers = #tpu.dot_dimension_numbers<[1], [0], [0], [1], [0, 0, 1, 1], [], []>} : vector<16x256xbf16>, vector<256x256xbf16>, vector<16x256xf32> -> vector<16x256xf32>
    %49 = arith.addf %44, %48 : vector<16x256xf32>
    %c0_55 = arith.constant 0 : index
    %c0_56 = arith.constant 0 : index
    %50 = vector.load %arg5[%c0_55, %c0_56] : memref<1x256xf32, #tpu.memory_space<vmem>>, vector<1x256xf32>
    %51 = vector.broadcast %50 : vector<1x256xf32> to vector<16x256xf32>
    %52 = arith.addf %49, %51 : vector<16x256xf32>
    %cst_57 = arith.constant 0.000000e+00 : f32
    %53 = vector.broadcast %cst_57 : f32 to vector<16x256xf32>
    %54 = arith.maximumf %52, %53 : vector<16x256xf32>
    %c0_58 = arith.constant 0 : index
    %c0_59 = arith.constant 0 : index
    %c0_60 = arith.constant 0 : index
    %55 = vector.load %arg6[%c0_58, %c0_59, %c0_60] : memref<1x16x256xf32, #tpu.memory_space<vmem>>, vector<1x16x256xf32>
    %56 = vector.shape_cast %55 : vector<1x16x256xf32> to vector<16x256xf32>
    %57 = vector.shape_cast %54 : vector<16x256xf32> to vector<1x16x256xf32>
    tpu.vector_store %arg6[%c0_58, %c0_59, %c0_60], %57 {strides = array<i32>} : memref<1x16x256xf32, #tpu.memory_space<vmem>>, vector<1x16x256xf32>,
    return
  }
  func.func @transform_0(%arg0: i32) -> (i32, i32, i32) {
    %c0_i32 = arith.constant 0 : i32
    %c0_i32_0 = arith.constant 0 : i32
    %c0_i32_1 = arith.constant 0 : i32
    return %arg0, %c0_i32, %c0_i32_0 : i32, i32, i32
  }
  func.func @transform_1(%arg0: i32) -> (i32, i32, i32) {
    %c0_i32 = arith.constant 0 : i32
    %c0_i32_0 = arith.constant 0 : i32
    %c0_i32_1 = arith.constant 0 : i32
    %c0_i32_2 = arith.constant 0 : i32
    return %c0_i32, %c0_i32_0, %c0_i32_1 : i32, i32, i32
  }
  func.func @transform_2(%arg0: i32) -> (i32, i32) {
    %c0_i32 = arith.constant 0 : i32
    %c0_i32_0 = arith.constant 0 : i32
    %c0_i32_1 = arith.constant 0 : i32
    return %c0_i32, %c0_i32_0 : i32, i32
  }
  func.func @transform_3(%arg0: i32) -> (i32, i32, i32) {
    %c0_i32 = arith.constant 0 : i32
    %c0_i32_0 = arith.constant 0 : i32
    %c0_i32_1 = arith.constant 0 : i32
    %c0_i32_2 = arith.constant 0 : i32
    return %c0_i32, %c0_i32_0, %c0_i32_1 : i32, i32, i32
  }
  func.func @transform_4(%arg0: i32) -> (i32, i32) {
    %c0_i32 = arith.constant 0 : i32
    %c0_i32_0 = arith.constant 0 : i32
    %c0_i32_1 = arith.constant 0 : i32
    return %c0_i32, %c0_i32_0 : i32, i32
  }
  func.func @transform_5(%arg0: i32) -> (i32, i32, i32) {
    %c0_i32 = arith.constant 0 : i32
    %c0_i32_0 = arith.constant 0 : i32
    %c0_i32_1 = arith.constant 0 : i32
    return %arg0, %c0_i32, %c0_i32_0 : i32, i32, i32
  }
}

</mosaic_0001>

<llo_original>
// kernel: _fused_block_nchw.1
$region0: #{_fused_block_nchw.1}
  #allocation0 [shape = 'u32[]', space=smem, size = 0x4, offset = 0x4, fixed_abs, tag = 'smem constant byte address 0x4 - core index']
  #allocation1 [shape = 'u32[72,128]{1,0:T(1,128)}', space=vmem, size = 0x9000, scoped, tag = 'internal scratch']
  #allocation2 [shape = 'bf16[18,64]{1,0:T(8,128)(2,1)}', space=vmem, size = 0x1800, scoped, tag = 'scratch operand']
  #allocation3 [shape = 'bf16[18,256]{1,0:T(8,128)(2,1)}', space=vmem, size = 0x3000, scoped, tag = 'scratch operand']
  %s0 = inlined_call_operand.vmem [shape: bf16[2,16,64], index: 0, kind: input, shape index: {}]
  %s1 = inlined_call_operand.vmem [shape: bf16[3,64,256], index: 1, kind: input, shape index: {}]
  %s2 = inlined_call_operand.vmem [shape: f32[1,256], index: 2, kind: input, shape index: {}]
  %s3 = inlined_call_operand.hbm [shape: bf16[3,256,256], index: 3, kind: input, shape index: {}]
  %s4 = inlined_call_operand.vmem [shape: f32[1,256], index: 4, kind: input, shape index: {}]
  %s5 = inlined_call_operand.vmem [shape: f32[2,16,256], index: 5, kind: output, shape index: {}]
  %s6 = sld [smem:[#allocation0]]
  $region57: #{_fused_block_nchw.1} parent=0
    _
  %s8 = ssub.s32 1, %s6
  %s9 = scalar_select 0, %s8, %s6
  $region1: #{_fused_block_nchw.1} parent=0
    #allocation4 [shape = 'u8[393216]{0}', space=vmem, size = 0x60000, scoped, tag = 'input window, operand 3, single buffered']
    #allocation5 [shape = 's32[2]{0}', space=sflag, size = 0x8, scoped, tag = 'scoped memory for _fused_block_nchw.1']
    %10 = vsyncpa [#allocation5], 0
    loop: start=0, step=1, limit=4
    $region2: #{_fused_block_nchw.1} parent=1 // loop_pre_header
      _
    $region3: #{_fused_block_nchw.1} parent=1 // loop_header
      %s12 = sphi 0, %s16
      %p13 = scmp.ge.s32.totalorder %s12, 4
      %s22 = sphi 0, %s24
      %s25 = sphi 0, %s22
      %s26 = sphi 0, %s25
      %s42 = sphi 0, %s26
      %s46 = sphi 0, %s46
      %s48 = sphi 0, %s46
      %s49 = sphi 0, %s48
      %s63 = sphi 0, %s49
      %s67 = sphi 0, %s67
      %s69 = sphi 0, %s67
      %s70 = sphi 0, %s69
      %s84 = sphi 0, %s70
      %s88 = sphi 0, %s88
      %s90 = sphi 0, %s88
      %s91 = sphi 0, %s90
      %s105 = sphi 0, %s91
      %s109 = sphi 0, %s109
      %s111 = sphi 0, %s109
      %s112 = sphi 0, %s111
      %s126 = sphi 0, %s112
      %s132 = sphi 0, %s134
      %s135 = sphi 0, %s132
      %s136 = sphi 0, %s135
      %s152 = sphi 0, %s136
    $region4: #{_fused_block_nchw.1} parent=1 // loop_header_branch
      %15 = sbr.rel (%p13) target = $region8
    $region5: #{_fused_block_nchw.1} parent=1 // loop_body
      %s17 = ssub.s32 %s12, 1
      %s18 = ssub.s32 %s12, 2
      %s19 = sadd.s32 %s12, 1
      %s20 = ssub.s32 %s12, %s19
      %p21 = scmp.eq.s32.totalorder %s20, 0
      %s23 = sadd.s32 %s22, 1
      %s24 = scalar_select %p21, %s22, %s23
      %p27 = pneg %p21
      %p28 = scmp.eq.s32.totalorder %s12, 1
      %p29 = por %p27, %p28
      %p30 = scmp.ne.s32.totalorder %s22, %s25
      %p31 = scmp.eq.s32.totalorder %s12, 0
      %p32 = por %p30, %p31
      %p33 = scmp.ne.s32.totalorder %s22, %s25
      %p34 = scmp.eq.s32.totalorder %s17, 1
      %p35 = por %p33, %p34
      %p36 = scmp.ne.s32.totalorder %s25, %s26
      %p37 = scmp.eq.s32.totalorder %s17, 0
      %p38 = por %p36, %p37
      %p39 = scmp.ne.s32.totalorder %s25, %s26
      %p40 = scmp.eq.s32.totalorder %s18, 1
      %p41 = por %p39, %p40
      %p43 = scmp.ne.s32.totalorder %s26, %s42
      %p44 = scmp.eq.s32.totalorder %s18, 0
      %p45 = por %p43, %p44
      %s47 = sadd.s32 %s46, 1
      %p50 = scmp.eq.s32.totalorder %s12, 1
      %p51 = scmp.ne.s32.totalorder %s46, %s48
      %p52 = scmp.eq.s32.totalorder %s12, 0
      %p53 = por %p51, %p52
      %p54 = scmp.ne.s32.totalorder %s46, %s48
      %p55 = scmp.eq.s32.totalorder %s17, 1
      %p56 = por %p54, %p55
      %p57 = scmp.ne.s32.totalorder %s48, %s49
      %p58 = scmp.eq.s32.totalorder %s17, 0
      %p59 = por %p57, %p58
      %p60 = scmp.ne.s32.totalorder %s48, %s49
      %p61 = scmp.eq.s32.totalorder %s18, 1
      %p62 = por %p60, %p61
      %p64 = scmp.ne.s32.totalorder %s49, %s63
      %p65 = scmp.eq.s32.totalorder %s18, 0
      %p66 = por %p64, %p65
      %s68 = sadd.s32 %s67, 1
      %p71 = scmp.eq.s32.totalorder %s12, 1
      %p72 = scmp.ne.s32.totalorder %s67, %s69
      %p73 = scmp.eq.s32.totalorder %s12, 0
      %p74 = por %p72, %p73
      %p75 = scmp.ne.s32.totalorder %s67, %s69
      %p76 = scmp.eq.s32.totalorder %s17, 1
      %p77 = por %p75, %p76
      %p78 = scmp.ne.s32.totalorder %s69, %s70
      %p79 = scmp.eq.s32.totalorder %s17, 0
      %p80 = por %p78, %p79
      %p81 = scmp.ne.s32.totalorder %s69, %s70
      %p82 = scmp.eq.s32.totalorder %s18, 1
      %p83 = por %p81, %p82
      %p85 = scmp.ne.s32.totalorder %s70, %s84
      %p86 = scmp.eq.s32.totalorder %s18, 0
      %p87 = por %p85, %p86
      %s89 = sadd.s32 %s88, 1
      %p92 = scmp.eq.s32.totalorder %s12, 1
      %p93 = scmp.ne.s32.totalorder %s88, %s90
      %p94 = scmp.eq.s32.totalorder %s12, 0
      %p95 = por %p93, %p94
      %p96 = scmp.ne.s32.totalorder %s88, %s90
      %p97 = scmp.eq.s32.totalorder %s17, 1
      %p98 = por %p96, %p97
      %p99 = scmp.ne.s32.totalorder %s90, %s91
      %p100 = scmp.eq.s32.totalorder %s17, 0
      %p101 = por %p99, %p100
      %p102 = scmp.ne.s32.totalorder %s90, %s91
      %p103 = scmp.eq.s32.totalorder %s18, 1
      %p104 = por %p102, %p103
      %p106 = scmp.ne.s32.totalorder %s91, %s105
      %p107 = scmp.eq.s32.totalorder %s18, 0
      %p108 = por %p106, %p107
      %s110 = sadd.s32 %s109, 1
      %p113 = scmp.eq.s32.totalorder %s12, 1
      %p114 = scmp.ne.s32.totalorder %s109, %s111
      %p115 = scmp.eq.s32.totalorder %s12, 0
      %p116 = por %p114, %p115
      %p117 = scmp.ne.s32.totalorder %s109, %s111
      %p118 = scmp.eq.s32.totalorder %s17, 1
      %p119 = por %p117, %p118
      %p120 = scmp.ne.s32.totalorder %s111, %s112
      %p121 = scmp.eq.s32.totalorder %s17, 0
      %p122 = por %p120, %p121
      %p123 = scmp.ne.s32.totalorder %s111, %s112
      %p124 = scmp.eq.s32.totalorder %s18, 1
      %p125 = por %p123, %p124
      %p127 = scmp.ne.s32.totalorder %s112, %s126
      %p128 = scmp.eq.s32.totalorder %s18, 0
      %p129 = por %p127, %p128
      %s130 = ssub.s32 %s12, %s19
      %p131 = scmp.eq.s32.totalorder %s130, 0
      %s133 = sadd.s32 %s132, 1
      %s134 = scalar_select %p131, %s132, %s133
      %p137 = pneg %p131
      %p138 = scmp.eq.s32.totalorder %s12, 1
      %p139 = por %p137, %p138
      %p140 = scmp.ne.s32.totalorder %s132, %s135
      %p141 = scmp.eq.s32.totalorder %s12, 0
      %p142 = por %p140, %p141
      %p143 = scmp.ne.s32.totalorder %s132, %s135
      %p144 = scmp.eq.s32.totalorder %s17, 1
      %p145 = por %p143, %p144
      %p146 = scmp.ne.s32.totalorder %s135, %s136
      %p147 = scmp.eq.s32.totalorder %s17, 0
      %p148 = por %p146, %p147
      %p149 = scmp.ne.s32.totalorder %s135, %s136
      %p150 = scmp.eq.s32.totalorder %s18, 1
      %p151 = por %p149, %p150
      %p153 = scmp.ne.s32.totalorder %s136, %s152
      %p154 = scmp.eq.s32.totalorder %s18, 0
      %p155 = por %p153, %p154
      %p156 = scmp.le.s32.totalorder 1, %s12
      %p157 = scmp.lt.s32.totalorder %s12, 3
      %p158 = pnand %p156, %p157
      %p159 = pneg %p158
      // Predicated region
      $region9: #{_fused_block_nchw.1} parent=5 // pred_check
        _
      $region10: #{_fused_block_nchw.1} parent=5 // pred_check_branch
        %161 = sbr.rel (%p158) target = $region12
      $region11: #{_fused_block_nchw.1} parent=5 // pred_region
        %s162 = ssub.s32 %s12, 1
        // Predicated region
        $region13: #{_fused_block_nchw.1} parent=11 // pred_check
          %p163 = pneg %p59
        $region14: #{_fused_block_nchw.1} parent=11 // pred_check_branch
          %165 = sbr.rel (%p163) target = $region16
        $region15: #{_fused_block_nchw.1} parent=11 // pred_region
          _
        $region16: #{_fused_block_nchw.1} parent=11 // pred_fallthru
          _
        // Predicated region
        $region17: #{_fused_block_nchw.1} parent=11 // pred_check
          %p166 = pneg %p80
        $region18: #{_fused_block_nchw.1} parent=11 // pred_check_branch
          %168 = sbr.rel (%p166) target = $region20
        $region19: #{_fused_block_nchw.1} parent=11 // pred_region
          _
        $region20: #{_fused_block_nchw.1} parent=11 // pred_fallthru
          _
        // Predicated region
        $region21: #{_fused_block_nchw.1} parent=11 // pred_check
          %p169 = pneg %p101
        $region22: #{_fused_block_nchw.1} parent=11 // pred_check_branch
          %171 = sbr.rel (%p169) target = $region24
        $region23: #{_fused_block_nchw.1} parent=11 // pred_region
          %173 = vsyncadd [#allocation5], 0
          %s174 = sshll.u32 %s3, 4
          %s175 = int_to_ptr.hbm [resolvable:$true] %s174
          %s176 = sshll.u32 [#allocation4], 4
          %s177 = int_to_ptr.vmem [resolvable:$true] %s176
          %182 = dma.hbm_to_vmem [thread:$0]  %s175, 12288, %s177, [#allocation5], 128, 128, 8
        $region24: #{_fused_block_nchw.1} parent=11 // pred_fallthru
          _
        // Predicated region
        $region25: #{_fused_block_nchw.1} parent=11 // pred_check
          %p183 = pneg %p122
        $region26: #{_fused_block_nchw.1} parent=11 // pred_check_branch
          %185 = sbr.rel (%p183) target = $region28
        $region27: #{_fused_block_nchw.1} parent=11 // pred_region
          _
        $region28: #{_fused_block_nchw.1} parent=11 // pred_fallthru
          _
      $region12: #{_fused_block_nchw.1} parent=5 // pred_fallthru
        _
      %p186 = scmp.lt.s32.totalorder %s12, 2
      // Predicated region
      $region29: #{_fused_block_nchw.1} parent=5 // pred_check
        %p187 = pneg %p186
      $region30: #{_fused_block_nchw.1} parent=5 // pred_check_branch
        %189 = sbr.rel (%p187) target = $region32
      $region31: #{_fused_block_nchw.1} parent=5 // pred_region
        // Predicated region
        $region33: #{_fused_block_nchw.1} parent=31 // pred_check
          %p190 = pneg %p32
        $region34: #{_fused_block_nchw.1} parent=31 // pred_check_branch
          %192 = sbr.rel (%p190) target = $region36
        $region35: #{_fused_block_nchw.1} parent=31 // pred_region
          %p193 = scmp.lt.s32.totalorder %s12, 1
          %s194 = scalar_select %p193, %s12, 1
          %s195 = smul.addr %s194, 2
          %s196 = smul.addr %s195, 4
          %s197 = scalar_lea.vmem %s0, %s196
        $region36: #{_fused_block_nchw.1} parent=31 // pred_fallthru
          _
      $region32: #{_fused_block_nchw.1} parent=5 // pred_fallthru
        _
      %p198 = scmp.le.s32.totalorder 1, %s12
      %p199 = scmp.lt.s32.totalorder %s12, 3
      %p200 = pnand %p198, %p199
      %p201 = pneg %p200
      // Predicated region
      $region37: #{_fused_block_nchw.1} parent=5 // pred_check
        _
      $region38: #{_fused_block_nchw.1} parent=5 // pred_check_branch
        %203 = sbr.rel (%p200) target = $region40
      $region39: #{_fused_block_nchw.1} parent=5 // pred_region
        %s204 = ssub.s32 %s12, 1
        // Predicated region
        $region41: #{_fused_block_nchw.1} parent=39 // pred_check
          %p205 = pneg %p101
        $region42: #{_fused_block_nchw.1} parent=39 // pred_check_branch
          %207 = sbr.rel (%p205) target = $region44
        $region43: #{_fused_block_nchw.1} parent=39 // pred_region
          %209 = dma.done [#allocation5], 12288
        $region44: #{_fused_block_nchw.1} parent=39 // pred_fallthru
          _
        %p210 = scmp.lt.s32.totalorder %s17, 1
        %s211 = scalar_select %p210, %s17, 1
        %s212 = smul.addr %s211, 2
        %s213 = smul.addr %s212, 4
        %s214 = scalar_lea.vmem %s0, %s213
        %p215 = pneg %p38
        %p216 = pneg %p35
        %p217 = pneg %p59
        %p218 = pneg %p56
        %p219 = pneg %p80
        %p220 = pneg %p77
        %p221 = pneg %p101
        %p222 = pneg %p98
        %p223 = pneg %p122
        %p224 = pneg %p119
        %p225 = pneg %p148
        %p226 = pneg %p145
        %p227 = scmp.lt.s32.totalorder %s17, 1
        %s228 = scalar_select %p227, %s17, 1
        %s229 = smul.addr %s228, 4
        %s230 = smul.addr %s229, 8
        %s231 = scalar_lea.vmem %s5, %s230
        %p232 = scmp.lt.s32.totalorder %s17, 1
        %s233 = scalar_select %p232, %s17, 1
        %s234 = smul.addr %s233, 2
        %s235 = smul.addr %s234, 4
        %s236 = scalar_lea.vmem %s0, %s235
        %p237 = scmp.lt.s32.totalorder %s17, 1
        %s238 = scalar_select %p237, %s17, 1
        %s239 = smul.addr %s238, 4
        %s240 = smul.addr %s239, 8
        %s241 = scalar_lea.vmem %s5, %s240
        %vm243 = vcmask 516096
        %vm244 = vsmask.f32 256
        %vm245 = vmand %vm243, %vm244
        %v246 = vld [vmem:[#allocation2] sm:$0x1]
        %v247 = vsel %vm245, 0, %v246
        %248 = vst [vmem:[#allocation2] sm:$0x1] %v247
        %vm249 = vsmask.f32 7938
        %vm250 = vmand %vm243, %vm249
        %v251 = vld [vmem:[#allocation2 + $0x8] sm:$0x1]
        %v252 = vsel %vm250, 0, %v251
        %253 = vst [vmem:[#allocation2 + $0x8] sm:$0x1] %v252
        %vm254 = vcmask 1040384
        %vm255 = vmand %vm254, %vm244
        %vm256 = vcmask 1044484
        %vm257 = vsmask.f32 4352
        %vm258 = vmand %vm256, %vm257
        %vm259 = vmor %vm258, %vm255
        %v260 = vld [vmem:[#allocation3] sm:$0x11]
        %v261 = vsel %vm259, 0, %v260
        %262 = vst [vmem:[#allocation3] sm:$0x11] %v261
        %vm263 = vmand %vm254, %vm249
        %vm264 = vsmask.f32 7954
        %vm265 = vmand %vm256, %vm264
        %vm266 = vmor %vm265, %vm263
        %v267 = vld [vmem:[#allocation3 + $0x10] sm:$0x11]
        %v268 = vsel %vm266, 0, %v267
        %269 = vst [vmem:[#allocation3 + $0x10] sm:$0x11] %v268
        %v270 = vld [vmem:[%s236] sm:$0xf]
        %v271 = vld [vmem:[%s236 + $0x4] sm:$0xf]
        %vm272 = vsmask.f32 4368
        %vm273 = vmor %vm244, %vm272
        %v275 = vshrl.u32 %v270, 16
        %v277 = vrot.slane %v275, 7
        %v278 = vshll.u32 %v270, 16
        %v280 = vor.u32 %v277, %v278
        %v281 = vrot.slane %v277, 4
        %v283 = vshrl.u32 %v271, 16
        %v285 = vrot.slane %v283, 7
        %v286 = vshll.u32 %v271, 16
        %v288 = vor.u32 %v285, %v286
        %v289 = vsel %vm273, %v281, %v288
        %v290 = vrot.slane %v285, 4
        %vm294 = vcmask 519168
        %vm295 = vmand %vm294, %vm249
        %v296 = vld [vmem:[#allocation2] sm:$0xf]
        %v297 = vsel %vm295, %v280, %v296
        %298 = vst [vmem:[#allocation2] sm:$0xf] %v297
        %vm299 = vcmask 519168
        %300 = vst.msk [vmem:[#allocation2 + $0x4] sm:$0xf] %vm299, %v289
        %v301 = vld [vmem:[#allocation2 + $0x8] sm:$0x1]
        %v302 = vsel %vm245, %v290, %v301
        %303 = vst [vmem:[#allocation2 + $0x8] sm:$0x1] %v302
        %v304 = vld [vmem:[#allocation2] sm:$0xf]
        %v305 = vld [vmem:[#allocation2 + $0x4] sm:$0xf]
        %v306 = vld [vmem:[%s1] sm:$0xff]
        %v307 = vld [vmem:[%s1 + $0x8] sm:$0xff]
        %v308 = vld [vmem:[%s1 + $0x10] sm:$0xff]
        %v309 = vld [vmem:[%s1 + $0x18] sm:$0xff]
        %v310 = vld [vmem:[%s1 + $0x20] sm:$0xff]
        %v311 = vld [vmem:[%s1 + $0x28] sm:$0xff]
        %v312 = vld [vmem:[%s1 + $0x30] sm:$0xff]
        %v313 = vld [vmem:[%s1 + $0x38] sm:$0xff]
        %v314 = vld [vmem:[#allocation2 + $0x8] sm:$0x1]
        %s315 = scalar_lea.vmem %s1, 64
        %v316 = vld [vmem:[%s315] sm:$0xff]
        %v317 = vld [vmem:[%s315 + $0x8] sm:$0xff]
        %v318 = vld [vmem:[%s315 + $0x10] sm:$0xff]
        %v319 = vld [vmem:[%s315 + $0x18] sm:$0xff]
        %v320 = vld [vmem:[%s315 + $0x20] sm:$0xff]
        %v321 = vld [vmem:[%s315 + $0x28] sm:$0xff]
        %v322 = vld [vmem:[%s315 + $0x30] sm:$0xff]
        %v323 = vld [vmem:[%s315 + $0x38] sm:$0xff]
        %v327 = vunpack.c.l.b16 %v304
        %v328 = vunpack.c.l.b16 %v305
        %v329 = vunpack.c.l.b16 %v314
        %v330 = vpack.c.b16 %v328, %v327
        %v331 = vpack.c.b16 %v329, %v329
        %vm332 = vsmask.f32 7424
        %v334 = vshrl.u32 %v330, 16
        %v336 = vshll.u32 %v330, 16
        %v338 = vrot.slane %v336, 1
        %v339 = vor.u32 %v334, %v338
        %v341 = vshll.u32 %v331, 16
        %v343 = vrot.slane %v341, 1
        %v344 = vsel %vm332, %v339, %v343
        %v353 = vunpack.c.l.b16 %v316
        %v354 = vunpack.c.h.b16 %v316
        %v355 = vunpack.c.l.b16 %v317
        %v356 = vunpack.c.h.b16 %v317
        %v357 = vunpack.c.l.b16 %v318
        %v358 = vunpack.c.h.b16 %v318
        %v359 = vunpack.c.l.b16 %v319
        %v360 = vunpack.c.h.b16 %v319
        %v361 = vunpack.c.l.b16 %v320
        %v362 = vunpack.c.h.b16 %v320
        %v363 = vunpack.c.l.b16 %v321
        %v364 = vunpack.c.h.b16 %v321
        %v365 = vunpack.c.l.b16 %v322
        %v366 = vunpack.c.h.b16 %v322
        %v367 = vunpack.c.l.b16 %v323
        %v368 = vunpack.c.h.b16 %v323
        %v369 = vpack.c.b16 %v355, %v353
        %v370 = vpack.c.b16 %v356, %v354
        %v371 = vpack.c.b16 %v359, %v357
        %v372 = vpack.c.b16 %v360, %v358
        %v373 = vpack.c.b16 %v363, %v361
        %v374 = vpack.c.b16 %v364, %v362
        %v375 = vpack.c.b16 %v367, %v365
        %v376 = vpack.c.b16 %v368, %v366
        %vm385 = vcmask 523264
        %v387 = vsel %vm385, %v344, 0
        %389 = vmatpush.bf16.msra.mxu0 0
        %390 = vmatpush.bf16.msra.mxu0 0
        %391 = vmatpush.bf16.msra.mxu0 0
        %392 = vmatpush.bf16.msra.mxu0 0
        %393 = vmatpush.bf16.msra.mxu0 %v375
        %394 = vmatpush.bf16.msra.mxu0 %v373
        %395 = vmatpush.bf16.msra.mxu0 %v371
        %396 = vmatpush.bf16.msra.mxu0 %v369
        %397 = vmatmul.bf16.gmra.mxu0 %v387
        %v398 = vpop.f32.mrf.mxu0
        %v399 = vadd.f32 0.0, %v398
        %v400 = vpop.f32.mrf.mxu0
        %v401 = vadd.f32 0.0, %v400
        %402 = vdwg.mxu0
        %403 = vmatpush.bf16.msra.mxu0 0
        %404 = vmatpush.bf16.msra.mxu0 0
        %405 = vmatpush.bf16.msra.mxu0 0
        %406 = vmatpush.bf16.msra.mxu0 0
        %407 = vmatpush.bf16.msra.mxu0 %v376
        %408 = vmatpush.bf16.msra.mxu0 %v374
        %409 = vmatpush.bf16.msra.mxu0 %v372
        %410 = vmatpush.bf16.msra.mxu0 %v370
        %411 = vmatmul.bf16.gmra.mxu0 %v387
        %v412 = vpop.f32.mrf.mxu0
        %v413 = vadd.f32 0.0, %v412
        %v414 = vpop.f32.mrf.mxu0
        %v415 = vadd.f32 0.0, %v414
        %416 = vdwg.mxu0
        %v425 = vunpack.c.l.b16 %v306
        %v426 = vunpack.c.h.b16 %v306
        %v427 = vunpack.c.l.b16 %v307
        %v428 = vunpack.c.h.b16 %v307
        %v429 = vunpack.c.l.b16 %v308
        %v430 = vunpack.c.h.b16 %v308
        %v431 = vunpack.c.l.b16 %v309
        %v432 = vunpack.c.h.b16 %v309
        %v433 = vunpack.c.l.b16 %v310
        %v434 = vunpack.c.h.b16 %v310
        %v435 = vunpack.c.l.b16 %v311
        %v436 = vunpack.c.h.b16 %v311
        %v437 = vunpack.c.l.b16 %v312
        %v438 = vunpack.c.h.b16 %v312
        %v439 = vunpack.c.l.b16 %v313
        %v440 = vunpack.c.h.b16 %v313
        %v441 = vpack.c.b16 %v427, %v425
        %v442 = vpack.c.b16 %v428, %v426
        %v443 = vpack.c.b16 %v431, %v429
        %v444 = vpack.c.b16 %v432, %v430
        %v445 = vpack.c.b16 %v435, %v433
        %v446 = vpack.c.b16 %v436, %v434
        %v447 = vpack.c.b16 %v439, %v437
        %v448 = vpack.c.b16 %v440, %v438
        %v457 = vsel %vm385, %v330, 0
        %459 = vmatpush.bf16.msra.mxu0 0
        %460 = vmatpush.bf16.msra.mxu0 0
        %461 = vmatpush.bf16.msra.mxu0 0
        %462 = vmatpush.bf16.msra.mxu0 0
        %463 = vmatpush.bf16.msra.mxu0 %v447
        %464 = vmatpush.bf16.msra.mxu0 %v445
        %465 = vmatpush.bf16.msra.mxu0 %v443
        %466 = vmatpush.bf16.msra.mxu0 %v441
        %467 = vmatmul.bf16.gmra.mxu0 %v457
        %v468 = vpop.f32.mrf.mxu0
        %v469 = vadd.f32 %v399, %v468
        %v470 = vpop.f32.mrf.mxu0
        %v471 = vadd.f32 %v401, %v470
        %472 = vdwg.mxu0
        %473 = vmatpush.bf16.msra.mxu0 0
        %474 = vmatpush.bf16.msra.mxu0 0
        %475 = vmatpush.bf16.msra.mxu0 0
        %476 = vmatpush.bf16.msra.mxu0 0
        %477 = vmatpush.bf16.msra.mxu0 %v448
        %478 = vmatpush.bf16.msra.mxu0 %v446
        %479 = vmatpush.bf16.msra.mxu0 %v444
        %480 = vmatpush.bf16.msra.mxu0 %v442
        %481 = vmatmul.bf16.gmra.mxu0 %v457
        %v482 = vpop.f32.mrf.mxu0
        %v483 = vadd.f32 %v413, %v482
        %v484 = vpop.f32.mrf.mxu0
        %v485 = vadd.f32 %v415, %v484
        %486 = vdwg.mxu0
        %v487 = vld [vmem:[#allocation2] sm:$0xe]
        %s488 = scalar_lea.vmem %s1, 128
        %v489 = vld [vmem:[%s488] sm:$0xff]
        %v490 = vld [vmem:[%s488 + $0x8] sm:$0xff]
        %v491 = vld [vmem:[%s488 + $0x10] sm:$0xff]
        %v492 = vld [vmem:[%s488 + $0x18] sm:$0xff]
        %v493 = vld [vmem:[%s488 + $0x20] sm:$0xff]
        %v494 = vld [vmem:[%s488 + $0x28] sm:$0xff]
        %v495 = vld [vmem:[%s488 + $0x30] sm:$0xff]
        %v496 = vld [vmem:[%s488 + $0x38] sm:$0xff]
        %v498 = vunpack.c.l.b16 %v487
        %v499 = vpack.c.b16 %v328, %v498
        %vm500 = vcmask 1046528
        %v501 = vrot.slane %v499, 1
        %v502 = vrot.slane %v331, 1
        %v503 = vsel %vm500, %v501, %v502
        %v512 = vunpack.c.l.b16 %v489
        %v513 = vunpack.c.h.b16 %v489
        %v514 = vunpack.c.l.b16 %v490
        %v515 = vunpack.c.h.b16 %v490
        %v516 = vunpack.c.l.b16 %v491
        %v517 = vunpack.c.h.b16 %v491
        %v518 = vunpack.c.l.b16 %v492
        %v519 = vunpack.c.h.b16 %v492
        %v520 = vunpack.c.l.b16 %v493
        %v521 = vunpack.c.h.b16 %v493
        %v522 = vunpack.c.l.b16 %v494
        %v523 = vunpack.c.h.b16 %v494
        %v524 = vunpack.c.l.b16 %v495
        %v525 = vunpack.c.h.b16 %v495
        %v526 = vunpack.c.l.b16 %v496
        %v527 = vunpack.c.h.b16 %v496
        %v528 = vpack.c.b16 %v514, %v512
        %v529 = vpack.c.b16 %v515, %v513
        %v530 = vpack.c.b16 %v518, %v516
        %v531 = vpack.c.b16 %v519, %v517
        %v532 = vpack.c.b16 %v522, %v520
        %v533 = vpack.c.b16 %v523, %v521
        %v534 = vpack.c.b16 %v526, %v524
        %v535 = vpack.c.b16 %v527, %v525
        %v545 = vsel %vm385, %v503, 0
        %547 = vmatpush.bf16.msra.mxu0 0
        %548 = vmatpush.bf16.msra.mxu0 0
        %549 = vmatpush.bf16.msra.mxu0 0
        %550 = vmatpush.bf16.msra.mxu0 0
        %551 = vmatpush.bf16.msra.mxu0 %v534
        %552 = vmatpush.bf16.msra.mxu0 %v532
        %553 = vmatpush.bf16.msra.mxu0 %v530
        %554 = vmatpush.bf16.msra.mxu0 %v528
        %555 = vmatmul.bf16.gmra.mxu0 %v545
        %v556 = vpop.f32.mrf.mxu0
        %v557 = vadd.f32 0.0, %v556
        %v558 = vpop.f32.mrf.mxu0
        %v559 = vadd.f32 0.0, %v558
        %560 = vdwg.mxu0
        %561 = vmatpush.bf16.msra.mxu0 0
        %562 = vmatpush.bf16.msra.mxu0 0
        %563 = vmatpush.bf16.msra.mxu0 0
        %564 = vmatpush.bf16.msra.mxu0 0
        %565 = vmatpush.bf16.msra.mxu0 %v535
        %566 = vmatpush.bf16.msra.mxu0 %v533
        %567 = vmatpush.bf16.msra.mxu0 %v531
        %568 = vmatpush.bf16.msra.mxu0 %v529
        %569 = vmatmul.bf16.gmra.mxu0 %v545
        %v570 = vpop.f32.mrf.mxu0
        %v571 = vadd.f32 0.0, %v570
        %v572 = vpop.f32.mrf.mxu0
        %v573 = vadd.f32 0.0, %v572
        %574 = vdwg.mxu0
        %v575 = vadd.f32 %v469, %v557
        %v576 = vadd.f32 %v483, %v571
        %v577 = vadd.f32 %v471, %v559
        %v578 = vadd.f32 %v485, %v573
        %v579 = vld [vmem:[%s2] sm:$0x3]
        %v581 = vperm.slane %v579, 0
        %v582 = vperm.slane %v579, 1
        %v585 = vadd.f32 %v575, %v581
        %v586 = vadd.f32 %v576, %v582
        %v587 = vadd.f32 %v577, %v581
        %v588 = vadd.f32 %v578, %v582
        %v589 = vmax.f32 %v585, 0.0
        %v590 = vmax.f32 %v586, 0.0
        %v591 = vmax.f32 %v587, 0.0
        %v592 = vmax.f32 %v588, 0.0
        %v593 = vpack.c.bf16 %v590, %v589
        %v594 = vpack.c.bf16 %v592, %v591
        %v596 = vshrl.u32 %v593, 16
        %v598 = vrot.slane %v596, 7
        %v599 = vshll.u32 %v593, 16
        %v601 = vor.u32 %v598, %v599
        %v602 = vrot.slane %v598, 4
        %v604 = vshrl.u32 %v594, 16
        %v606 = vrot.slane %v604, 7
        %v607 = vshll.u32 %v594, 16
        %v609 = vor.u32 %v606, %v607
        %v610 = vsel %vm273, %v602, %v609
        %v611 = vrot.slane %v606, 4
        %vm615 = vcmask 1043456
        %vm616 = vmand %vm615, %vm249
        %vm617 = vcmask 1047556
        %vm618 = vmand %vm617, %vm264
        %vm619 = vmor %vm618, %vm616
        %v620 = vld [vmem:[#allocation3] sm:$0xff]
        %v621 = vsel %vm619, %v601, %v620
        %622 = vst [vmem:[#allocation3] sm:$0xff] %v621
        %623 = vst [vmem:[#allocation3 + $0x8] sm:$0xff] %v610
        %v624 = vld [vmem:[#allocation3 + $0x10] sm:$0x11]
        %v625 = vsel %vm259, %v611, %v624
        %626 = vst [vmem:[#allocation3 + $0x10] sm:$0x11] %v625
        %v627 = vld [vmem:[#allocation3] sm:$0xff]
        %v628 = vld [vmem:[#allocation3 + $0x8] sm:$0xff]
        %v629 = vld [vmem:[#allocation4] sm:$0xff]
        %v630 = vld [vmem:[#allocation4 + $0x8] sm:$0xff]
        %v631 = vld [vmem:[#allocation4 + $0x10] sm:$0xff]
        %v632 = vld [vmem:[#allocation4 + $0x18] sm:$0xff]
        %v633 = vld [vmem:[#allocation4 + $0x20] sm:$0xff]
        %v634 = vld [vmem:[#allocation4 + $0x28] sm:$0xff]
        %v635 = vld [vmem:[#allocation4 + $0x30] sm:$0xff]
        %v636 = vld [vmem:[#allocation4 + $0x38] sm:$0xff]
        %v637 = vld [vmem:[#allocation4 + $0x40] sm:$0xff]
        %v638 = vld [vmem:[#allocation4 + $0x48] sm:$0xff]
        %v639 = vld [vmem:[#allocation4 + $0x50] sm:$0xff]
        %v640 = vld [vmem:[#allocation4 + $0x58] sm:$0xff]
        %v641 = vld [vmem:[#allocation4 + $0x60] sm:$0xff]
        %v642 = vld [vmem:[#allocation4 + $0x68] sm:$0xff]
        %v643 = vld [vmem:[#allocation4 + $0x70] sm:$0xff]
        %v644 = vld [vmem:[#allocation4 + $0x78] sm:$0xff]
        %v645 = vld [vmem:[#allocation4 + $0x80] sm:$0xff]
        %v646 = vld [vmem:[#allocation4 + $0x88] sm:$0xff]
        %v647 = vld [vmem:[#allocation4 + $0x90] sm:$0xff]
        %v648 = vld [vmem:[#allocation4 + $0x98] sm:$0xff]
        %v649 = vld [vmem:[#allocation4 + $0xa0] sm:$0xff]
        %v650 = vld [vmem:[#allocation4 + $0xa8] sm:$0xff]
        %v651 = vld [vmem:[#allocation4 + $0xb0] sm:$0xff]
        %v652 = vld [vmem:[#allocation4 + $0xb8] sm:$0xff]
        %v653 = vld [vmem:[#allocation4 + $0xc0] sm:$0xff]
        %v654 = vld [vmem:[#allocation4 + $0xc8] sm:$0xff]
        %v655 = vld [vmem:[#allocation4 + $0xd0] sm:$0xff]
        %v656 = vld [vmem:[#allocation4 + $0xd8] sm:$0xff]
        %v657 = vld [vmem:[#allocation4 + $0xe0] sm:$0xff]
        %v658 = vld [vmem:[#allocation4 + $0xe8] sm:$0xff]
        %v659 = vld [vmem:[#allocation4 + $0xf0] sm:$0xff]
        %v660 = vld [vmem:[#allocation4 + $0xf8] sm:$0xff]
        %v661 = vld [vmem:[#allocation3 + $0x10] sm:$0x11]
        %s662 = scalar_lea.vmem [#allocation4], 256
        %v663 = vld [vmem:[%s662] sm:$0xff]
        %v664 = vld [vmem:[%s662 + $0x8] sm:$0xff]
        %v665 = vld [vmem:[%s662 + $0x10] sm:$0xff]
        %v666 = vld [vmem:[%s662 + $0x18] sm:$0xff]
        %v667 = vld [vmem:[%s662 + $0x20] sm:$0xff]
        %v668 = vld [vmem:[%s662 + $0x28] sm:$0xff]
        %v669 = vld [vmem:[%s662 + $0x30] sm:$0xff]
        %v670 = vld [vmem:[%s662 + $0x38] sm:$0xff]
        %v671 = vld [vmem:[%s662 + $0x40] sm:$0xff]
        %v672 = vld [vmem:[%s662 + $0x48] sm:$0xff]
        %v673 = vld [vmem:[%s662 + $0x50] sm:$0xff]
        %v674 = vld [vmem:[%s662 + $0x58] sm:$0xff]
        %v675 = vld [vmem:[%s662 + $0x60] sm:$0xff]
        %v676 = vld [vmem:[%s662 + $0x68] sm:$0xff]
        %v677 = vld [vmem:[%s662 + $0x70] sm:$0xff]
        %v678 = vld [vmem:[%s662 + $0x78] sm:$0xff]
        %v679 = vld [vmem:[%s662 + $0x80] sm:$0xff]
        %v680 = vld [vmem:[%s662 + $0x88] sm:$0xff]
        %v681 = vld [vmem:[%s662 + $0x90] sm:$0xff]
        %v682 = vld [vmem:[%s662 + $0x98] sm:$0xff]
        %v683 = vld [vmem:[%s662 + $0xa0] sm:$0xff]
        %v684 = vld [vmem:[%s662 + $0xa8] sm:$0xff]
        %v685 = vld [vmem:[%s662 + $0xb0] sm:$0xff]
        %v686 = vld [vmem:[%s662 + $0xb8] sm:$0xff]
        %v687 = vld [vmem:[%s662 + $0xc0] sm:$0xff]
        %v688 = vld [vmem:[%s662 + $0xc8] sm:$0xff]
        %v689 = vld [vmem:[%s662 + $0xd0] sm:$0xff]
        %v690 = vld [vmem:[%s662 + $0xd8] sm:$0xff]
        %v691 = vld [vmem:[%s662 + $0xe0] sm:$0xff]
        %v692 = vld [vmem:[%s662 + $0xe8] sm:$0xff]
        %v693 = vld [vmem:[%s662 + $0xf0] sm:$0xff]
        %v694 = vld [vmem:[%s662 + $0xf8] sm:$0xff]
        %v698 = vunpack.c.l.b16 %v627
        %v699 = vunpack.c.h.b16 %v627
        %v700 = vunpack.c.l.b16 %v628
        %v701 = vunpack.c.h.b16 %v628
        %v702 = vunpack.c.l.b16 %v661
        %v703 = vunpack.c.h.b16 %v661
        %v704 = vpack.c.b16 %v700, %v698
        %v705 = vpack.c.b16 %v701, %v699
        %v706 = vpack.c.b16 %v702, %v702
        %v707 = vpack.c.b16 %v703, %v703
        %v709 = vshrl.u32 %v704, 16
        %v711 = vshll.u32 %v704, 16
        %v713 = vrot.slane %v711, 1
        %v714 = vor.u32 %v709, %v713
        %v716 = vshll.u32 %v706, 16
        %v718 = vrot.slane %v716, 1
        %v719 = vsel %vm332, %v714, %v718
        %v721 = vshrl.u32 %v705, 16
        %v723 = vshll.u32 %v705, 16
        %v725 = vrot.slane %v723, 1
        %v726 = vor.u32 %v721, %v725
        %v728 = vshll.u32 %v707, 16
        %v730 = vrot.slane %v728, 1
        %v731 = vsel %vm332, %v726, %v730
        %v766 = vunpack.c.l.b16 %v663
        %v767 = vunpack.c.h.b16 %v663
        %v768 = vunpack.c.l.b16 %v664
        %v769 = vunpack.c.h.b16 %v664
        %v770 = vunpack.c.l.b16 %v665
        %v771 = vunpack.c.h.b16 %v665
        %v772 = vunpack.c.l.b16 %v666
        %v773 = vunpack.c.h.b16 %v666
        %v774 = vunpack.c.l.b16 %v667
        %v775 = vunpack.c.h.b16 %v667
        %v776 = vunpack.c.l.b16 %v668
        %v777 = vunpack.c.h.b16 %v668
        %v778 = vunpack.c.l.b16 %v669
        %v779 = vunpack.c.h.b16 %v669
        %v780 = vunpack.c.l.b16 %v670
        %v781 = vunpack.c.h.b16 %v670
        %v782 = vunpack.c.l.b16 %v671
        %v783 = vunpack.c.h.b16 %v671
        %v784 = vunpack.c.l.b16 %v672
        %v785 = vunpack.c.h.b16 %v672
        %v786 = vunpack.c.l.b16 %v673
        %v787 = vunpack.c.h.b16 %v673
        %v788 = vunpack.c.l.b16 %v674
        %v789 = vunpack.c.h.b16 %v674
        %v790 = vunpack.c.l.b16 %v675
        %v791 = vunpack.c.h.b16 %v675
        %v792 = vunpack.c.l.b16 %v676
        %v793 = vunpack.c.h.b16 %v676
        %v794 = vunpack.c.l.b16 %v677
        %v795 = vunpack.c.h.b16 %v677
        %v796 = vunpack.c.l.b16 %v678
        %v797 = vunpack.c.h.b16 %v678
        %v798 = vunpack.c.l.b16 %v679
        %v799 = vunpack.c.h.b16 %v679
        %v800 = vunpack.c.l.b16 %v680
        %v801 = vunpack.c.h.b16 %v680
        %v802 = vunpack.c.l.b16 %v681
        %v803 = vunpack.c.h.b16 %v681
        %v804 = vunpack.c.l.b16 %v682
        %v805 = vunpack.c.h.b16 %v682
        %v806 = vunpack.c.l.b16 %v683
        %v807 = vunpack.c.h.b16 %v683
        %v808 = vunpack.c.l.b16 %v684
        %v809 = vunpack.c.h.b16 %v684
        %v810 = vunpack.c.l.b16 %v685
        %v811 = vunpack.c.h.b16 %v685
        %v812 = vunpack.c.l.b16 %v686
        %v813 = vunpack.c.h.b16 %v686
        %v814 = vunpack.c.l.b16 %v687
        %v815 = vunpack.c.h.b16 %v687
        %v816 = vunpack.c.l.b16 %v688
        %v817 = vunpack.c.h.b16 %v688
        %v818 = vunpack.c.l.b16 %v689
        %v819 = vunpack.c.h.b16 %v689
        %v820 = vunpack.c.l.b16 %v690
        %v821 = vunpack.c.h.b16 %v690
        %v822 = vunpack.c.l.b16 %v691
        %v823 = vunpack.c.h.b16 %v691
        %v824 = vunpack.c.l.b16 %v692
        %v825 = vunpack.c.h.b16 %v692
        %v826 = vunpack.c.l.b16 %v693
        %v827 = vunpack.c.h.b16 %v693
        %v828 = vunpack.c.l.b16 %v694
        %v829 = vunpack.c.h.b16 %v694
        %v830 = vpack.c.b16 %v768, %v766
        %v831 = vpack.c.b16 %v769, %v767
        %v832 = vpack.c.b16 %v772, %v770
        %v833 = vpack.c.b16 %v773, %v771
        %v834 = vpack.c.b16 %v776, %v774
        %v835 = vpack.c.b16 %v777, %v775
        %v836 = vpack.c.b16 %v780, %v778
        %v837 = vpack.c.b16 %v781, %v779
        %v838 = vpack.c.b16 %v784, %v782
        %v839 = vpack.c.b16 %v785, %v783
        %v840 = vpack.c.b16 %v788, %v786
        %v841 = vpack.c.b16 %v789, %v787
        %v842 = vpack.c.b16 %v792, %v790
        %v843 = vpack.c.b16 %v793, %v791
        %v844 = vpack.c.b16 %v796, %v794
        %v845 = vpack.c.b16 %v797, %v795
        %v846 = vpack.c.b16 %v800, %v798
        %v847 = vpack.c.b16 %v801, %v799
        %v848 = vpack.c.b16 %v804, %v802
        %v849 = vpack.c.b16 %v805, %v803
        %v850 = vpack.c.b16 %v808, %v806
        %v851 = vpack.c.b16 %v809, %v807
        %v852 = vpack.c.b16 %v812, %v810
        %v853 = vpack.c.b16 %v813, %v811
        %v854 = vpack.c.b16 %v816, %v814
        %v855 = vpack.c.b16 %v817, %v815
        %v856 = vpack.c.b16 %v820, %v818
        %v857 = vpack.c.b16 %v821, %v819
        %v858 = vpack.c.b16 %v824, %v822
        %v859 = vpack.c.b16 %v825, %v823
        %v860 = vpack.c.b16 %v828, %v826
        %v861 = vpack.c.b16 %v829, %v827
        %894 = vmatpush.bf16.msra.mxu0 %v844
        %895 = vmatpush.bf16.msra.mxu0 %v842
        %896 = vmatpush.bf16.msra.mxu0 %v840
        %897 = vmatpush.bf16.msra.mxu0 %v838
        %898 = vmatpush.bf16.msra.mxu0 %v836
        %899 = vmatpush.bf16.msra.mxu0 %v834
        %900 = vmatpush.bf16.msra.mxu0 %v832
        %901 = vmatpush.bf16.msra.mxu0 %v830
        %902 = vmatmul.bf16.gmra.mxu0 %v719
        %v903 = vpop.f32.mrf.mxu0
        %v904 = vadd.f32 0.0, %v903
        %v905 = vpop.f32.mrf.mxu0
        %v906 = vadd.f32 0.0, %v905
        %907 = vdwg.mxu0
        %908 = vmatpush.bf16.msra.mxu0 %v860
        %909 = vmatpush.bf16.msra.mxu0 %v858
        %910 = vmatpush.bf16.msra.mxu0 %v856
        %911 = vmatpush.bf16.msra.mxu0 %v854
        %912 = vmatpush.bf16.msra.mxu0 %v852
        %913 = vmatpush.bf16.msra.mxu0 %v850
        %914 = vmatpush.bf16.msra.mxu0 %v848
        %915 = vmatpush.bf16.msra.mxu0 %v846
        %916 = vmatmul.bf16.gmra.mxu0 %v731
        %v917 = vpop.f32.mrf.mxu0
        %v918 = vadd.f32 %v904, %v917
        %v919 = vpop.f32.mrf.mxu0
        %v920 = vadd.f32 %v906, %v919
        %921 = vdwg.mxu0
        %922 = vmatpush.bf16.msra.mxu0 %v845
        %923 = vmatpush.bf16.msra.mxu0 %v843
        %924 = vmatpush.bf16.msra.mxu0 %v841
        %925 = vmatpush.bf16.msra.mxu0 %v839
        %926 = vmatpush.bf16.msra.mxu0 %v837
        %927 = vmatpush.bf16.msra.mxu0 %v835
        %928 = vmatpush.bf16.msra.mxu0 %v833
        %929 = vmatpush.bf16.msra.mxu0 %v831
        %930 = vmatmul.bf16.gmra.mxu0 %v719
        %v931 = vpop.f32.mrf.mxu0
        %v932 = vadd.f32 0.0, %v931
        %v933 = vpop.f32.mrf.mxu0
        %v934 = vadd.f32 0.0, %v933
        %935 = vdwg.mxu0
        %936 = vmatpush.bf16.msra.mxu0 %v861
        %937 = vmatpush.bf16.msra.mxu0 %v859
        %938 = vmatpush.bf16.msra.mxu0 %v857
        %939 = vmatpush.bf16.msra.mxu0 %v855
        %940 = vmatpush.bf16.msra.mxu0 %v853
        %941 = vmatpush.bf16.msra.mxu0 %v851
        %942 = vmatpush.bf16.msra.mxu0 %v849
        %943 = vmatpush.bf16.msra.mxu0 %v847
        %944 = vmatmul.bf16.gmra.mxu0 %v731
        %v945 = vpop.f32.mrf.mxu0
        %v946 = vadd.f32 %v932, %v945
        %v947 = vpop.f32.mrf.mxu0
        %v948 = vadd.f32 %v934, %v947
        %949 = vdwg.mxu0
        %v984 = vunpack.c.l.b16 %v629
        %v985 = vunpack.c.h.b16 %v629
        %v986 = vunpack.c.l.b16 %v630
        %v987 = vunpack.c.h.b16 %v630
        %v988 = vunpack.c.l.b16 %v631
        %v989 = vunpack.c.h.b16 %v631
        %v990 = vunpack.c.l.b16 %v632
        %v991 = vunpack.c.h.b16 %v632
        %v992 = vunpack.c.l.b16 %v633
        %v993 = vunpack.c.h.b16 %v633
        %v994 = vunpack.c.l.b16 %v634
        %v995 = vunpack.c.h.b16 %v634
        %v996 = vunpack.c.l.b16 %v635
        %v997 = vunpack.c.h.b16 %v635
        %v998 = vunpack.c.l.b16 %v636
        %v999 = vunpack.c.h.b16 %v636
        %v1000 = vunpack.c.l.b16 %v637
        %v1001 = vunpack.c.h.b16 %v637
        %v1002 = vunpack.c.l.b16 %v638
        %v1003 = vunpack.c.h.b16 %v638
        %v1004 = vunpack.c.l.b16 %v639
        %v1005 = vunpack.c.h.b16 %v639
        %v1006 = vunpack.c.l.b16 %v640
        %v1007 = vunpack.c.h.b16 %v640
        %v1008 = vunpack.c.l.b16 %v641
        %v1009 = vunpack.c.h.b16 %v641
        %v1010 = vunpack.c.l.b16 %v642
        %v1011 = vunpack.c.h.b16 %v642
        %v1012 = vunpack.c.l.b16 %v643
        %v1013 = vunpack.c.h.b16 %v643
        %v1014 = vunpack.c.l.b16 %v644
        %v1015 = vunpack.c.h.b16 %v644
        %v1016 = vunpack.c.l.b16 %v645
        %v1017 = vunpack.c.h.b16 %v645
        %v1018 = vunpack.c.l.b16 %v646
        %v1019 = vunpack.c.h.b16 %v646
        %v1020 = vunpack.c.l.b16 %v647
        %v1021 = vunpack.c.h.b16 %v647
        %v1022 = vunpack.c.l.b16 %v648
        %v1023 = vunpack.c.h.b16 %v648
        %v1024 = vunpack.c.l.b16 %v649
        %v1025 = vunpack.c.h.b16 %v649
        %v1026 = vunpack.c.l.b16 %v650
        %v1027 = vunpack.c.h.b16 %v650
        %v1028 = vunpack.c.l.b16 %v651
        %v1029 = vunpack.c.h.b16 %v651
        %v1030 = vunpack.c.l.b16 %v652
        %v1031 = vunpack.c.h.b16 %v652
        %v1032 = vunpack.c.l.b16 %v653
        %v1033 = vunpack.c.h.b16 %v653
        %v1034 = vunpack.c.l.b16 %v654
        %v1035 = vunpack.c.h.b16 %v654
        %v1036 = vunpack.c.l.b16 %v655
        %v1037 = vunpack.c.h.b16 %v655
        %v1038 = vunpack.c.l.b16 %v656
        %v1039 = vunpack.c.h.b16 %v656
        %v1040 = vunpack.c.l.b16 %v657
        %v1041 = vunpack.c.h.b16 %v657
        %v1042 = vunpack.c.l.b16 %v658
        %v1043 = vunpack.c.h.b16 %v658
        %v1044 = vunpack.c.l.b16 %v659
        %v1045 = vunpack.c.h.b16 %v659
        %v1046 = vunpack.c.l.b16 %v660
        %v1047 = vunpack.c.h.b16 %v660
        %v1048 = vpack.c.b16 %v986, %v984
        %v1049 = vpack.c.b16 %v987, %v985
        %v1050 = vpack.c.b16 %v990, %v988
        %v1051 = vpack.c.b16 %v991, %v989
        %v1052 = vpack.c.b16 %v994, %v992
        %v1053 = vpack.c.b16 %v995, %v993
        %v1054 = vpack.c.b16 %v998, %v996
        %v1055 = vpack.c.b16 %v999, %v997
        %v1056 = vpack.c.b16 %v1002, %v1000
        %v1057 = vpack.c.b16 %v1003, %v1001
        %v1058 = vpack.c.b16 %v1006, %v1004
        %v1059 = vpack.c.b16 %v1007, %v1005
        %v1060 = vpack.c.b16 %v1010, %v1008
        %v1061 = vpack.c.b16 %v1011, %v1009
        %v1062 = vpack.c.b16 %v1014, %v1012
        %v1063 = vpack.c.b16 %v1015, %v1013
        %v1064 = vpack.c.b16 %v1018, %v1016
        %v1065 = vpack.c.b16 %v1019, %v1017
        %v1066 = vpack.c.b16 %v1022, %v1020
        %v1067 = vpack.c.b16 %v1023, %v1021
        %v1068 = vpack.c.b16 %v1026, %v1024
        %v1069 = vpack.c.b16 %v1027, %v1025
        %v1070 = vpack.c.b16 %v1030, %v1028
        %v1071 = vpack.c.b16 %v1031, %v1029
        %v1072 = vpack.c.b16 %v1034, %v1032
        %v1073 = vpack.c.b16 %v1035, %v1033
        %v1074 = vpack.c.b16 %v1038, %v1036
        %v1075 = vpack.c.b16 %v1039, %v1037
        %v1076 = vpack.c.b16 %v1042, %v1040
        %v1077 = vpack.c.b16 %v1043, %v1041
        %v1078 = vpack.c.b16 %v1046, %v1044
        %v1079 = vpack.c.b16 %v1047, %v1045
        %1112 = vmatpush.bf16.msra.mxu0 %v1062
        %1113 = vmatpush.bf16.msra.mxu0 %v1060
        %1114 = vmatpush.bf16.msra.mxu0 %v1058
        %1115 = vmatpush.bf16.msra.mxu0 %v1056
        %1116 = vmatpush.bf16.msra.mxu0 %v1054
        %1117 = vmatpush.bf16.msra.mxu0 %v1052
        %1118 = vmatpush.bf16.msra.mxu0 %v1050
        %1119 = vmatpush.bf16.msra.mxu0 %v1048
        %1120 = vmatmul.bf16.gmra.mxu0 %v704
        %v1121 = vpop.f32.mrf.mxu0
        %v1122 = vadd.f32 %v918, %v1121
        %v1123 = vpop.f32.mrf.mxu0
        %v1124 = vadd.f32 %v920, %v1123
        %1125 = vdwg.mxu0
        %1126 = vmatpush.bf16.msra.mxu0 %v1078
        %1127 = vmatpush.bf16.msra.mxu0 %v1076
        %1128 = vmatpush.bf16.msra.mxu0 %v1074
        %1129 = vmatpush.bf16.msra.mxu0 %v1072
        %1130 = vmatpush.bf16.msra.mxu0 %v1070
        %1131 = vmatpush.bf16.msra.mxu0 %v1068
        %1132 = vmatpush.bf16.msra.mxu0 %v1066
        %1133 = vmatpush.bf16.msra.mxu0 %v1064
        %1134 = vmatmul.bf16.gmra.mxu0 %v705
        %v1135 = vpop.f32.mrf.mxu0
        %v1136 = vadd.f32 %v1122, %v1135
        %v1137 = vpop.f32.mrf.mxu0
        %v1138 = vadd.f32 %v1124, %v1137
        %1139 = vdwg.mxu0
        %1140 = vmatpush.bf16.msra.mxu0 %v1063
        %1141 = vmatpush.bf16.msra.mxu0 %v1061
        %1142 = vmatpush.bf16.msra.mxu0 %v1059
        %1143 = vmatpush.bf16.msra.mxu0 %v1057
        %1144 = vmatpush.bf16.msra.mxu0 %v1055
        %1145 = vmatpush.bf16.msra.mxu0 %v1053
        %1146 = vmatpush.bf16.msra.mxu0 %v1051
        %1147 = vmatpush.bf16.msra.mxu0 %v1049
        %1148 = vmatmul.bf16.gmra.mxu0 %v704
        %v1149 = vpop.f32.mrf.mxu0
        %v1150 = vadd.f32 %v946, %v1149
        %v1151 = vpop.f32.mrf.mxu0
        %v1152 = vadd.f32 %v948, %v1151
        %1153 = vdwg.mxu0
        %1154 = vmatpush.bf16.msra.mxu0 %v1079
        %1155 = vmatpush.bf16.msra.mxu0 %v1077
        %1156 = vmatpush.bf16.msra.mxu0 %v1075
        %1157 = vmatpush.bf16.msra.mxu0 %v1073
        %1158 = vmatpush.bf16.msra.mxu0 %v1071
        %1159 = vmatpush.bf16.msra.mxu0 %v1069
        %1160 = vmatpush.bf16.msra.mxu0 %v1067
        %1161 = vmatpush.bf16.msra.mxu0 %v1065
        %1162 = vmatmul.bf16.gmra.mxu0 %v705
        %v1163 = vpop.f32.mrf.mxu0
        %v1164 = vadd.f32 %v1150, %v1163
        %v1165 = vpop.f32.mrf.mxu0
        %v1166 = vadd.f32 %v1152, %v1165
        %1167 = vdwg.mxu0
        %v1168 = vld [vmem:[#allocation3] sm:$0xee]
        %s1169 = scalar_lea.vmem [#allocation4], 512
        %v1170 = vld [vmem:[%s1169] sm:$0xff]
        %v1171 = vld [vmem:[%s1169 + $0x8] sm:$0xff]
        %v1172 = vld [vmem:[%s1169 + $0x10] sm:$0xff]
        %v1173 = vld [vmem:[%s1169 + $0x18] sm:$0xff]
        %v1174 = vld [vmem:[%s1169 + $0x20] sm:$0xff]
        %v1175 = vld [vmem:[%s1169 + $0x28] sm:$0xff]
        %v1176 = vld [vmem:[%s1169 + $0x30] sm:$0xff]
        %v1177 = vld [vmem:[%s1169 + $0x38] sm:$0xff]
        %v1178 = vld [vmem:[%s1169 + $0x40] sm:$0xff]
        %v1179 = vld [vmem:[%s1169 + $0x48] sm:$0xff]
        %v1180 = vld [vmem:[%s1169 + $0x50] sm:$0xff]
        %v1181 = vld [vmem:[%s1169 + $0x58] sm:$0xff]
        %v1182 = vld [vmem:[%s1169 + $0x60] sm:$0xff]
        %v1183 = vld [vmem:[%s1169 + $0x68] sm:$0xff]
        %v1184 = vld [vmem:[%s1169 + $0x70] sm:$0xff]
        %v1185 = vld [vmem:[%s1169 + $0x78] sm:$0xff]
        %v1186 = vld [vmem:[%s1169 + $0x80] sm:$0xff]
        %v1187 = vld [vmem:[%s1169 + $0x88] sm:$0xff]
        %v1188 = vld [vmem:[%s1169 + $0x90] sm:$0xff]
        %v1189 = vld [vmem:[%s1169 + $0x98] sm:$0xff]
        %v1190 = vld [vmem:[%s1169 + $0xa0] sm:$0xff]
        %v1191 = vld [vmem:[%s1169 + $0xa8] sm:$0xff]
        %v1192 = vld [vmem:[%s1169 + $0xb0] sm:$0xff]
        %v1193 = vld [vmem:[%s1169 + $0xb8] sm:$0xff]
        %v1194 = vld [vmem:[%s1169 + $0xc0] sm:$0xff]
        %v1195 = vld [vmem:[%s1169 + $0xc8] sm:$0xff]
        %v1196 = vld [vmem:[%s1169 + $0xd0] sm:$0xff]
        %v1197 = vld [vmem:[%s1169 + $0xd8] sm:$0xff]
        %v1198 = vld [vmem:[%s1169 + $0xe0] sm:$0xff]
        %v1199 = vld [vmem:[%s1169 + $0xe8] sm:$0xff]
        %v1200 = vld [vmem:[%s1169 + $0xf0] sm:$0xff]
        %v1201 = vld [vmem:[%s1169 + $0xf8] sm:$0xff]
        %v1203 = vunpack.c.l.b16 %v1168
        %v1204 = vunpack.c.h.b16 %v1168
        %v1205 = vpack.c.b16 %v700, %v1203
        %v1206 = vpack.c.b16 %v701, %v1204
        %v1207 = vrot.slane %v1205, 1
        %v1208 = vrot.slane %v706, 1
        %v1209 = vsel %vm500, %v1207, %v1208
        %v1210 = vrot.slane %v1206, 1
        %v1211 = vrot.slane %v707, 1
        %v1212 = vsel %vm500, %v1210, %v1211
        %v1247 = vunpack.c.l.b16 %v1170
        %v1248 = vunpack.c.h.b16 %v1170
        %v1249 = vunpack.c.l.b16 %v1171
        %v1250 = vunpack.c.h.b16 %v1171
        %v1251 = vunpack.c.l.b16 %v1172
        %v1252 = vunpack.c.h.b16 %v1172
        %v1253 = vunpack.c.l.b16 %v1173
        %v1254 = vunpack.c.h.b16 %v1173
        %v1255 = vunpack.c.l.b16 %v1174
        %v1256 = vunpack.c.h.b16 %v1174
        %v1257 = vunpack.c.l.b16 %v1175
        %v1258 = vunpack.c.h.b16 %v1175
        %v1259 = vunpack.c.l.b16 %v1176
        %v1260 = vunpack.c.h.b16 %v1176
        %v1261 = vunpack.c.l.b16 %v1177
        %v1262 = vunpack.c.h.b16 %v1177
        %v1263 = vunpack.c.l.b16 %v1178
        %v1264 = vunpack.c.h.b16 %v1178
        %v1265 = vunpack.c.l.b16 %v1179
        %v1266 = vunpack.c.h.b16 %v1179
        %v1267 = vunpack.c.l.b16 %v1180
        %v1268 = vunpack.c.h.b16 %v1180
        %v1269 = vunpack.c.l.b16 %v1181
        %v1270 = vunpack.c.h.b16 %v1181
        %v1271 = vunpack.c.l.b16 %v1182
        %v1272 = vunpack.c.h.b16 %v1182
        %v1273 = vunpack.c.l.b16 %v1183
        %v1274 = vunpack.c.h.b16 %v1183
        %v1275 = vunpack.c.l.b16 %v1184
        %v1276 = vunpack.c.h.b16 %v1184
        %v1277 = vunpack.c.l.b16 %v1185
        %v1278 = vunpack.c.h.b16 %v1185
        %v1279 = vunpack.c.l.b16 %v1186
        %v1280 = vunpack.c.h.b16 %v1186
        %v1281 = vunpack.c.l.b16 %v1187
        %v1282 = vunpack.c.h.b16 %v1187
        %v1283 = vunpack.c.l.b16 %v1188
        %v1284 = vunpack.c.h.b16 %v1188
        %v1285 = vunpack.c.l.b16 %v1189
        %v1286 = vunpack.c.h.b16 %v1189
        %v1287 = vunpack.c.l.b16 %v1190
        %v1288 = vunpack.c.h.b16 %v1190
        %v1289 = vunpack.c.l.b16 %v1191
        %v1290 = vunpack.c.h.b16 %v1191
        %v1291 = vunpack.c.l.b16 %v1192
        %v1292 = vunpack.c.h.b16 %v1192
        %v1293 = vunpack.c.l.b16 %v1193
        %v1294 = vunpack.c.h.b16 %v1193
        %v1295 = vunpack.c.l.b16 %v1194
        %v1296 = vunpack.c.h.b16 %v1194
        %v1297 = vunpack.c.l.b16 %v1195
        %v1298 = vunpack.c.h.b16 %v1195
        %v1299 = vunpack.c.l.b16 %v1196
        %v1300 = vunpack.c.h.b16 %v1196
        %v1301 = vunpack.c.l.b16 %v1197
        %v1302 = vunpack.c.h.b16 %v1197
        %v1303 = vunpack.c.l.b16 %v1198
        %v1304 = vunpack.c.h.b16 %v1198
        %v1305 = vunpack.c.l.b16 %v1199
        %v1306 = vunpack.c.h.b16 %v1199
        %v1307 = vunpack.c.l.b16 %v1200
        %v1308 = vunpack.c.h.b16 %v1200
        %v1309 = vunpack.c.l.b16 %v1201
        %v1310 = vunpack.c.h.b16 %v1201
        %v1311 = vpack.c.b16 %v1249, %v1247
        %v1312 = vpack.c.b16 %v1250, %v1248
        %v1313 = vpack.c.b16 %v1253, %v1251
        %v1314 = vpack.c.b16 %v1254, %v1252
        %v1315 = vpack.c.b16 %v1257, %v1255
        %v1316 = vpack.c.b16 %v1258, %v1256
        %v1317 = vpack.c.b16 %v1261, %v1259
        %v1318 = vpack.c.b16 %v1262, %v1260
        %v1319 = vpack.c.b16 %v1265, %v1263
        %v1320 = vpack.c.b16 %v1266, %v1264
        %v1321 = vpack.c.b16 %v1269, %v1267
        %v1322 = vpack.c.b16 %v1270, %v1268
        %v1323 = vpack.c.b16 %v1273, %v1271
        %v1324 = vpack.c.b16 %v1274, %v1272
        %v1325 = vpack.c.b16 %v1277, %v1275
        %v1326 = vpack.c.b16 %v1278, %v1276
        %v1327 = vpack.c.b16 %v1281, %v1279
        %v1328 = vpack.c.b16 %v1282, %v1280
        %v1329 = vpack.c.b16 %v1285, %v1283
        %v1330 = vpack.c.b16 %v1286, %v1284
        %v1331 = vpack.c.b16 %v1289, %v1287
        %v1332 = vpack.c.b16 %v1290, %v1288
        %v1333 = vpack.c.b16 %v1293, %v1291
        %v1334 = vpack.c.b16 %v1294, %v1292
        %v1335 = vpack.c.b16 %v1297, %v1295
        %v1336 = vpack.c.b16 %v1298, %v1296
        %v1337 = vpack.c.b16 %v1301, %v1299
        %v1338 = vpack.c.b16 %v1302, %v1300
        %v1339 = vpack.c.b16 %v1305, %v1303
        %v1340 = vpack.c.b16 %v1306, %v1304
        %v1341 = vpack.c.b16 %v1309, %v1307
        %v1342 = vpack.c.b16 %v1310, %v1308
        %1375 = vmatpush.bf16.msra.mxu0 %v1325
        %1376 = vmatpush.bf16.msra.mxu0 %v1323
        %1377 = vmatpush.bf16.msra.mxu0 %v1321
        %1378 = vmatpush.bf16.msra.mxu0 %v1319
        %1379 = vmatpush.bf16.msra.mxu0 %v1317
        %1380 = vmatpush.bf16.msra.mxu0 %v1315
        %1381 = vmatpush.bf16.msra.mxu0 %v1313
        %1382 = vmatpush.bf16.msra.mxu0 %v1311
        %1383 = vmatmul.bf16.gmra.mxu0 %v1209
        %v1384 = vpop.f32.mrf.mxu0
        %v1385 = vadd.f32 0.0, %v1384
        %v1386 = vpop.f32.mrf.mxu0
        %v1387 = vadd.f32 0.0, %v1386
        %1388 = vdwg.mxu0
        %1389 = vmatpush.bf16.msra.mxu0 %v1341
        %1390 = vmatpush.bf16.msra.mxu0 %v1339
        %1391 = vmatpush.bf16.msra.mxu0 %v1337
        %1392 = vmatpush.bf16.msra.mxu0 %v1335
        %1393 = vmatpush.bf16.msra.mxu0 %v1333
        %1394 = vmatpush.bf16.msra.mxu0 %v1331
        %1395 = vmatpush.bf16.msra.mxu0 %v1329
        %1396 = vmatpush.bf16.msra.mxu0 %v1327
        %1397 = vmatmul.bf16.gmra.mxu0 %v1212
        %v1398 = vpop.f32.mrf.mxu0
        %v1399 = vadd.f32 %v1385, %v1398
        %v1400 = vpop.f32.mrf.mxu0
        %v1401 = vadd.f32 %v1387, %v1400
        %1402 = vdwg.mxu0
        %1403 = vmatpush.bf16.msra.mxu0 %v1326
        %1404 = vmatpush.bf16.msra.mxu0 %v1324
        %1405 = vmatpush.bf16.msra.mxu0 %v1322
        %1406 = vmatpush.bf16.msra.mxu0 %v1320
        %1407 = vmatpush.bf16.msra.mxu0 %v1318
        %1408 = vmatpush.bf16.msra.mxu0 %v1316
        %1409 = vmatpush.bf16.msra.mxu0 %v1314
        %1410 = vmatpush.bf16.msra.mxu0 %v1312
        %1411 = vmatmul.bf16.gmra.mxu0 %v1209
        %v1412 = vpop.f32.mrf.mxu0
        %v1413 = vadd.f32 0.0, %v1412
        %v1414 = vpop.f32.mrf.mxu0
        %v1415 = vadd.f32 0.0, %v1414
        %1416 = vdwg.mxu0
        %1417 = vmatpush.bf16.msra.mxu0 %v1342
        %1418 = vmatpush.bf16.msra.mxu0 %v1340
        %1419 = vmatpush.bf16.msra.mxu0 %v1338
        %1420 = vmatpush.bf16.msra.mxu0 %v1336
        %1421 = vmatpush.bf16.msra.mxu0 %v1334
        %1422 = vmatpush.bf16.msra.mxu0 %v1332
        %1423 = vmatpush.bf16.msra.mxu0 %v1330
        %1424 = vmatpush.bf16.msra.mxu0 %v1328
        %1425 = vmatmul.bf16.gmra.mxu0 %v1212
        %v1426 = vpop.f32.mrf.mxu0
        %v1427 = vadd.f32 %v1413, %v1426
        %v1428 = vpop.f32.mrf.mxu0
        %v1429 = vadd.f32 %v1415, %v1428
        %1430 = vdwg.mxu0
        %v1431 = vadd.f32 %v1136, %v1399
        %v1432 = vadd.f32 %v1164, %v1427
        %v1433 = vadd.f32 %v1138, %v1401
        %v1434 = vadd.f32 %v1166, %v1429
        %v1435 = vld [vmem:[%s4] sm:$0x3]
        %v1437 = vperm.slane %v1435, 0
        %v1438 = vperm.slane %v1435, 1
        %v1441 = vadd.f32 %v1431, %v1437
        %v1442 = vadd.f32 %v1432, %v1438
        %v1443 = vadd.f32 %v1433, %v1437
        %v1444 = vadd.f32 %v1434, %v1438
        %v1445 = vmax.f32 %v1441, 0.0
        %v1446 = vmax.f32 %v1442, 0.0
        %v1447 = vmax.f32 %v1443, 0.0
        %v1448 = vmax.f32 %v1444, 0.0
        %1449 = vst [vmem:[%s241] sm:$0xff] %v1445
        %1450 = vst [vmem:[%s241 + $0x8] sm:$0xff] %v1446
        %1451 = vst [vmem:[%s241 + $0x10] sm:$0xff] %v1447
        %1452 = vst [vmem:[%s241 + $0x18] sm:$0xff] %v1448
        %p1453 = scmp.lt.s32.totalorder %s17, 1
        %s1454 = scalar_select %p1453, %s17, 1
        %s1455 = smul.addr %s1454, 4
        %s1456 = smul.addr %s1455, 8
        %s1457 = scalar_lea.vmem %s5, %s1456
        // Predicated region
        $region45: #{_fused_block_nchw.1} parent=39 // pred_check
          %p1458 = pneg %p145
        $region46: #{_fused_block_nchw.1} parent=39 // pred_check_branch
          %1460 = sbr.rel (%p1458) target = $region48
        $region47: #{_fused_block_nchw.1} parent=39 // pred_region
          _
        $region48: #{_fused_block_nchw.1} parent=39 // pred_fallthru
          _
      $region40: #{_fused_block_nchw.1} parent=5 // pred_fallthru
        _
      %p1461 = scmp.le.s32.totalorder 2, %s12
      // Predicated region
      $region49: #{_fused_block_nchw.1} parent=5 // pred_check
        %p1462 = pneg %p1461
      $region50: #{_fused_block_nchw.1} parent=5 // pred_check_branch
        %1464 = sbr.rel (%p1462) target = $region52
      $region51: #{_fused_block_nchw.1} parent=5 // pred_region
        %s1465 = ssub.s32 %s12, 2
        // Predicated region
        $region53: #{_fused_block_nchw.1} parent=51 // pred_check
          %p1466 = pneg %p151
        $region54: #{_fused_block_nchw.1} parent=51 // pred_check_branch
          %1468 = sbr.rel (%p1466) target = $region56
        $region55: #{_fused_block_nchw.1} parent=51 // pred_region
          %p1469 = scmp.lt.s32.totalorder %s18, 1
          %s1470 = scalar_select %p1469, %s18, 1
          %s1471 = smul.addr %s1470, 4
          %s1472 = smul.addr %s1471, 8
          %s1473 = scalar_lea.vmem %s5, %s1472
        $region56: #{_fused_block_nchw.1} parent=51 // pred_fallthru
          _
      $region52: #{_fused_block_nchw.1} parent=5 // pred_fallthru
        _
    $region6: #{_fused_block_nchw.1} parent=1 // loop_footer
      %s16 = sadd.s32 1, %s12
    $region7: #{_fused_block_nchw.1} parent=1 // loop_footer_branch
      %11 = sbr.rel target = $region3
    $region8: #{_fused_block_nchw.1} parent=1 // loop_exit
      _
    %1474 = vsyncpa [#allocation5], 1
    %s1475 = scalar_lea.sflag [#allocation5], 1
    %1476 = vsyncpa %s1475, 1

</llo_original>
